<compile_context>
chip_gen: v7x
topology: tpu7x:2x2x1
jax: 0.10.0
libtpu: 0.0.40
codegen_flags: <defaults>
</compile_context>

<pallas_src>
import functools

import jax
import jax.numpy as jnp
from jax import lax
from jax.experimental import pallas as pl
from jax.experimental.pallas import tpu as pltpu


LANE = 128      # TPU lane width
SUBLANE = 8     # f32 sublane count


def _round_up(x, m):
    return ((x + m - 1) // m) * m


# ---------------------------------------------------------------------------
# Kernel
# ---------------------------------------------------------------------------
def _mlp_fused_kernel(x_ref, *refs, num_layers):
    """One batch tile through the whole MLP.

    refs = (w_0, b_0, ..., w_{L-1}, b_{L-1}, o_ref).
    Hidden weights: (K, H) bf16, hidden biases: (1, H) f32.
    Final weight: (1, K) bf16 row, final bias: (1, 1) f32.
    """
    o_ref = refs[-1]
    h = x_ref[...]                                            # (TM, Din) f32

    # Hidden layers: h = relu(h @ W + b). bf16 MXU operands, f32 accumulate,
    # bias + ReLU in f32 on the VPU.
    for l in range(num_layers - 1):
        w_ref = refs[2 * l]
        b_ref = refs[2 * l + 1]
        y = jnp.dot(h.astype(w_ref.dtype), w_ref[...],
                    preferred_element_type=jnp.float32)       # (TM, H) f32
        h = jnp.maximum(y + b_ref[...], 0.0)

    # Final layer (Dout = 1): out[0, m] = sum_k w[0, k] * h[m, k] + b.
    # Contracting the last dims of both operands yields a (1, TM) result, so
    # the single HBM store of this kernel is an unmasked, lane-dense row.
    w_ref = refs[2 * (num_layers - 1)]
    b_ref = refs[2 * (num_layers - 1) + 1]
    out_row = lax.dot_general(
        w_ref[...], h.astype(w_ref.dtype),
        (((1,), (1,)), ((), ())),
        preferred_element_type=jnp.float32)                   # (1, TM)
    out_row = out_row + b_ref[...]                            # (1, 1) broadcast
    o_ref[...] = out_row.reshape(o_ref.shape).astype(o_ref.dtype)


# ---------------------------------------------------------------------------
# One-time parameter packing (done at init time, NOT per forward call)
# ---------------------------------------------------------------------------
def prepare_mlp_params(params, compute_dtype=jnp.bfloat16):
    """Pack raw (w:(din,dout) f32, b:(dout,) f32) params for the fused kernel:

    * hidden output widths zero-padded to multiples of 128 lanes (ReLU(0)=0 so
      padded activation lanes stay exactly zero),
    * next layer's input rows zero-padded to match,
    * weights cast to bf16 (MXU operands), biases kept f32 reshaped to (1, H),
    * final layer stored as a (1, K) bf16 row + (1, 1) f32 bias.
    """
    num_layers = len(params)
    prepped = []
    k_in = params[0][0].shape[0]           # layer-0 K = Din, left unpadded
    for l, (w, b) in enumerate(params):
        din, dout = w.shape
        if din != k_in:                    # match previous (padded) width
            w = jnp.pad(w, ((0, k_in - din), (0, 0)))
        if l < num_layers - 1:
            h_pad = _round_up(dout, LANE)
            if h_pad != dout:
                w = jnp.pad(w, ((0, 0), (0, h_pad - dout)))
                b = jnp.pad(b, ((0, h_pad - dout),))
            prepped.append((jnp.asarray(w, compute_dtype),
                            jnp.asarray(b, jnp.float32).reshape(1, h_pad)))
            k_in = h_pad
        else:
            assert dout == 1, "final layer must produce a single output"
            prepped.append((jnp.asarray(w, compute_dtype).reshape(1, k_in),
                            jnp.asarray(b, jnp.float32).reshape(1, 1)))
    return prepped


# ---------------------------------------------------------------------------
# Forward
# ---------------------------------------------------------------------------
def mlp_forward(prepped_params, x):
    """Fused MLP forward.  x: (B, Din) f32 -> (B, 1) f32."""
    B, Din = x.shape
    num_layers = len(prepped_params)
    w0 = prepped_params[0][0]
    k0 = w0.shape[1] if num_layers == 1 else w0.shape[0]
    assert k0 == Din, (k0, Din)

    # --- batch tile size: big TM amortises per-grid-step overhead, capped so
    # live activations (TM x widest, f32 + bf16 copies) don't blow the vreg
    # file into heavy VMEM spill (tighter cap matters most on v5e).
    widths = [Din] + [w.shape[1] for w, _ in prepped_params[:-1]]
    widest = max(widths)
    if widest >= 1024:
        tm_cap = 128
    elif widest >= 512:
        tm_cap = 256
    else:
        tm_cap = 512

    # Align batch to the f32 sublane count (copies x only when B % 8 != 0).
    B8 = _round_up(B, SUBLANE)
    if B8 != B:
        x = jnp.pad(x, ((0, B8 - B), (0, 0)))
    TM = min(tm_cap, B8)
    n_tiles = pl.cdiv(B8, TM)   # partial last tile allowed: its garbage rows
                                # are sliced off below and nothing reduces
                                # across the batch inside the kernel.

    # --- flat inputs + BlockSpecs -----------------------------------------
    flat_inputs = [x]
    in_specs = [pl.BlockSpec((TM, Din), lambda i: (i, 0))]   # double-buffered
    flops = 0
    weight_bytes = 0
    for w, b in prepped_params:
        flat_inputs += [w, b]
        # Grid-invariant (index_map -> 0): DMA'd once, kept VMEM-resident for
        # every batch tile; single-buffered so they don't pay 2x VMEM.
        in_specs += [
            pl.BlockSpec(w.shape, lambda i: (0, 0), pipeline_mode=pl.Buffered(1)),
            pl.BlockSpec(b.shape, lambda i: (0, 0), pipeline_mode=pl.Buffered(1)),
        ]
        weight_bytes += w.size * w.dtype.itemsize + b.size * b.dtype.itemsize
        flops += 2 * n_tiles * TM * int(w.size)

    # --- explicit VMEM budget ----------------------------------------------
    x_tile_bytes = TM * Din * 4
    out_tile_bytes = TM * 4
    act_headroom = 4 * TM * widest * 4          # live f32/bf16 activations + spill
    vmem_needed = (weight_bytes                             # single-buffered
                   + 2 * (x_tile_bytes + out_tile_bytes)    # double-buffered tiles
                   + act_headroom)
    try:
        vmem_physical = int(pltpu.get_tpu_info().vmem_capacity_bytes)
    except Exception:
        vmem_physical = 64 * 1024 * 1024        # v7x per-core physical (smallest)
    vmem_budget = vmem_physical * 3 // 4        # leave headroom for Mosaic scratch
    assert vmem_needed <= vmem_budget, (
        f"fused MLP needs ~{vmem_needed >> 20} MiB VMEM, budget "
        f"{vmem_budget >> 20} MiB")
    # TODO(synk): add a K-tiled grid axis + f32 accumulator scratch (pl.when
    # init/finalize) for MLPs whose resident weights exceed the VMEM budget.
    vmem_limit = min(max(32 * 1024 * 1024, vmem_needed + (8 << 20)), vmem_budget)

    bytes_accessed = B8 * Din * 4 + weight_bytes + n_tiles * TM * 4

    kernel = functools.partial(_mlp_fused_kernel, num_layers=num_layers)
    out = pl.pallas_call(
        kernel,
        out_shape=jax.ShapeDtypeStruct((n_tiles, 1, TM), jnp.float32),
        grid=(n_tiles,),
        in_specs=in_specs,
        out_specs=pl.BlockSpec((1, 1, TM), lambda i: (i, 0, 0)),
        compiler_params=pltpu.CompilerParams(
            dimension_semantics=("parallel",),   # shard batch tiles across TCs
            vmem_limit_bytes=int(vmem_limit),
        ),
        cost_estimate=pl.CostEstimate(
            flops=int(flops), transcendentals=0,
            bytes_accessed=int(bytes_accessed)),
    )(*flat_inputs)

    # Lane-packed (n_tiles, 1, TM) -> (B, 1); tail rows (alignment / partial
    # tile) are dropped here.
    return out.reshape(n_tiles * TM)[:B].reshape(B, 1)


# ---------------------------------------------------------------------------
# Parameter init matching the PyTorch module's shapes / default init bounds
# ---------------------------------------------------------------------------
def init_mlp_params(key, n_inputs, n_hiddens):
    """nn.Linear(in, out) has weight (out, in), bias (out,). We store the
    weight transposed as (in, out) so the kernel computes x @ W directly."""
    dims = [n_inputs] + list(n_hiddens) + [1]
    params = []
    for i in range(len(dims) - 1):
        din, dout = dims[i], dims[i + 1]
        key, kw, kb = jax.random.split(key, 3)
        bound = 1.0 / jnp.sqrt(jnp.float32(din))
        w = jax.random.uniform(kw, (din, dout), jnp.float32, -bound, bound)
        b = jax.random.uniform(kb, (dout,), jnp.float32, -bound, bound)
        params.append((w, b))
    return params


if __name__ == "__main__":
    key = jax.random.PRNGKey(0)
    k_params, k_x = jax.random.split(key)

    batch = 8
    n_inputs = 32
    n_hiddens = [64, 32]

    params = init_mlp_params(k_params, n_inputs, n_hiddens)
    prepped = prepare_mlp_params(params)      # one-time packing (bf16 + padding)
    x = jax.random.normal(k_x, (batch, n_inputs), dtype=jnp.float32)

    out = mlp_forward(prepped, x)
    out = jax.block_until_ready(out)
    assert out.shape == (batch, 1), out.shape

    # Reference: plain-JAX f32 forward of the original module (hidden layers
    # Linear+ReLU, final Linear). bf16 MXU operands give ~1e-3 level deltas.
    ref = x
    for w, b in params[:-1]:
        ref = jnp.maximum(ref @ w + b, 0.0)
    ref = ref @ params[-1][0] + params[-1][1]
    assert jnp.allclose(out, ref, atol=3e-2, rtol=3e-2), (
        float(jnp.max(jnp.abs(out - ref))))

    print("KERNEL_OK")
</pallas_src>

<mosaic_0001>
module attributes {stable_mosaic.version = 11 : i64} {
  func.func @_mlp_fused_kernel(%arg0: i32, %arg1: memref<8x32xf32, #tpu.memory_space<vmem>>, %arg2: memref<32x128xbf16, #tpu.memory_space<vmem>>, %arg3: memref<1x128xf32, #tpu.memory_space<vmem>>, %arg4: memref<128x128xbf16, #tpu.memory_space<vmem>>, %arg5: memref<1x128xf32, #tpu.memory_space<vmem>>, %arg6: memref<1x128xbf16, #tpu.memory_space<vmem>>, %arg7: memref<1x1xf32, #tpu.memory_space<vmem>>, %arg8: memref<1x1x8xf32, #tpu.memory_space<vmem>>) attributes {dimension_semantics = [#tpu.dimension_semantics<parallel>], iteration_bounds = array<i64: 1>, scalar_prefetch = 0 : i64, scratch_operands = 0 : i64, tpu.core_type = #tpu.core_type<tc>, window_params = [{transform_indices = @transform_0, window_bounds = array<i64: 8, 32>}, {pipeline_mode = #tpu.pipeline_mode<synchronous>, transform_indices = @transform_1, window_bounds = array<i64: 32, 128>}, {pipeline_mode = #tpu.pipeline_mode<synchronous>, transform_indices = @transform_2, window_bounds = array<i64: 1, 128>}, {pipeline_mode = #tpu.pipeline_mode<synchronous>, transform_indices = @transform_3, window_bounds = array<i64: 128, 128>}, {pipeline_mode = #tpu.pipeline_mode<synchronous>, transform_indices = @transform_4, window_bounds = array<i64: 1, 128>}, {pipeline_mode = #tpu.pipeline_mode<synchronous>, transform_indices = @transform_5, window_bounds = array<i64: 1, 128>}, {pipeline_mode = #tpu.pipeline_mode<synchronous>, transform_indices = @transform_6, window_bounds = array<i64: 1, 1>}, {transform_indices = @transform_7, window_bounds = array<i64: 1, 1, 8>}]} {
    %c0 = arith.constant 0 : index
    %c0_0 = arith.constant 0 : index
    %0 = vector.load %arg1[%c0, %c0_0] : memref<8x32xf32, #tpu.memory_space<vmem>>, vector<8x32xf32>
    %1 = arith.truncf %0 : vector<8x32xf32> to vector<8x32xbf16>
    %c0_1 = arith.constant 0 : index
    %c0_2 = arith.constant 0 : index
    %2 = vector.load %arg2[%c0_1, %c0_2] : memref<32x128xbf16, #tpu.memory_space<vmem>>, vector<32x128xbf16>
    %cst = arith.constant dense<0.000000e+00> : vector<8x128xf32>
    %3 = tpu.matmul %1, %2, %cst {dimension_numbers = #tpu.dot_dimension_numbers<[1], [0], [0], [1], [0, 0, 1, 1], [], []>} : vector<8x32xbf16>, vector<32x128xbf16>, vector<8x128xf32> -> vector<8x128xf32>
    %c0_3 = arith.constant 0 : index
    %c0_4 = arith.constant 0 : index
    %4 = vector.load %arg3[%c0_3, %c0_4] : memref<1x128xf32, #tpu.memory_space<vmem>>, vector<1x128xf32>
    %5 = vector.broadcast %4 : vector<1x128xf32> to vector<8x128xf32>
    %6 = arith.addf %3, %5 : vector<8x128xf32>
    %cst_5 = arith.constant 0.000000e+00 : f32
    %7 = vector.broadcast %cst_5 : f32 to vector<8x128xf32>
    %8 = arith.maximumf %6, %7 : vector<8x128xf32>
    %9 = arith.truncf %8 : vector<8x128xf32> to vector<8x128xbf16>
    %c0_6 = arith.constant 0 : index
    %c0_7 = arith.constant 0 : index
    %10 = vector.load %arg4[%c0_6, %c0_7] : memref<128x128xbf16, #tpu.memory_space<vmem>>, vector<128x128xbf16>
    %cst_8 = arith.constant dense<0.000000e+00> : vector<8x128xf32>
    %11 = tpu.matmul %9, %10, %cst_8 {dimension_numbers = #tpu.dot_dimension_numbers<[1], [0], [0], [1], [0, 0, 1, 1], [], []>} : vector<8x128xbf16>, vector<128x128xbf16>, vector<8x128xf32> -> vector<8x128xf32>
    %c0_9 = arith.constant 0 : index
    %c0_10 = arith.constant 0 : index
    %12 = vector.load %arg5[%c0_9, %c0_10] : memref<1x128xf32, #tpu.memory_space<vmem>>, vector<1x128xf32>
    %13 = vector.broadcast %12 : vector<1x128xf32> to vector<8x128xf32>
    %14 = arith.addf %11, %13 : vector<8x128xf32>
    %cst_11 = arith.constant 0.000000e+00 : f32
    %15 = vector.broadcast %cst_11 : f32 to vector<8x128xf32>
    %16 = arith.maximumf %14, %15 : vector<8x128xf32>
    %c0_12 = arith.constant 0 : index
    %c0_13 = arith.constant 0 : index
    %17 = vector.load %arg6[%c0_12, %c0_13] : memref<1x128xbf16, #tpu.memory_space<vmem>>, vector<1x128xbf16>
    %18 = arith.truncf %16 : vector<8x128xf32> to vector<8x128xbf16>
    %cst_14 = arith.constant dense<0.000000e+00> : vector<1x8xf32>
    %19 = tpu.matmul %17, %18, %cst_14 {dimension_numbers = #tpu.dot_dimension_numbers<[1], [1], [0], [0], [0, 0, 1, 0], [], []>} : vector<1x128xbf16>, vector<8x128xbf16>, vector<1x8xf32> -> vector<1x8xf32>
    %c0_15 = arith.constant 0 : index
    %c0_16 = arith.constant 0 : index
    %20 = vector.load %arg7[%c0_15, %c0_16] : memref<1x1xf32, #tpu.memory_space<vmem>>, vector<1x1xf32>
    %21 = vector.broadcast %20 : vector<1x1xf32> to vector<1x8xf32>
    %22 = arith.addf %19, %21 : vector<1x8xf32>
    %23 = vector.shape_cast %22 : vector<1x8xf32> to vector<1x1x8xf32>
    %c0_17 = arith.constant 0 : index
    %c0_18 = arith.constant 0 : index
    %c0_19 = arith.constant 0 : index
    %24 = vector.load %arg8[%c0_17, %c0_18, %c0_19] : memref<1x1x8xf32, #tpu.memory_space<vmem>>, vector<1x1x8xf32>
    tpu.vector_store %arg8[%c0_17, %c0_18, %c0_19], %23 {strides = array<i32>} : memref<1x1x8xf32, #tpu.memory_space<vmem>>, vector<1x1x8xf32>,
    return
  }
  func.func @transform_0(%arg0: i32) -> (i32, i32) {
    %c0_i32 = arith.constant 0 : i32
    %c0_i32_0 = arith.constant 0 : i32
    return %arg0, %c0_i32 : i32, i32
  }
  func.func @transform_1(%arg0: i32) -> (i32, i32) {
    %c0_i32 = arith.constant 0 : i32
    %c0_i32_0 = arith.constant 0 : i32
    %c0_i32_1 = arith.constant 0 : i32
    return %c0_i32, %c0_i32_0 : i32, i32
  }
  func.func @transform_2(%arg0: i32) -> (i32, i32) {
    %c0_i32 = arith.constant 0 : i32
    %c0_i32_0 = arith.constant 0 : i32
    %c0_i32_1 = arith.constant 0 : i32
    return %c0_i32, %c0_i32_0 : i32, i32
  }
  func.func @transform_3(%arg0: i32) -> (i32, i32) {
    %c0_i32 = arith.constant 0 : i32
    %c0_i32_0 = arith.constant 0 : i32
    %c0_i32_1 = arith.constant 0 : i32
    return %c0_i32, %c0_i32_0 : i32, i32
  }
  func.func @transform_4(%arg0: i32) -> (i32, i32) {
    %c0_i32 = arith.constant 0 : i32
    %c0_i32_0 = arith.constant 0 : i32
    %c0_i32_1 = arith.constant 0 : i32
    return %c0_i32, %c0_i32_0 : i32, i32
  }
  func.func @transform_5(%arg0: i32) -> (i32, i32) {
    %c0_i32 = arith.constant 0 : i32
    %c0_i32_0 = arith.constant 0 : i32
    %c0_i32_1 = arith.constant 0 : i32
    return %c0_i32, %c0_i32_0 : i32, i32
  }
  func.func @transform_6(%arg0: i32) -> (i32, i32) {
    %c0_i32 = arith.constant 0 : i32
    %c0_i32_0 = arith.constant 0 : i32
    %c0_i32_1 = arith.constant 0 : i32
    return %c0_i32, %c0_i32_0 : i32, i32
  }
  func.func @transform_7(%arg0: i32) -> (i32, i32, i32) {
    %c0_i32 = arith.constant 0 : i32
    %c0_i32_0 = arith.constant 0 : i32
    %c0_i32_1 = arith.constant 0 : i32
    return %arg0, %c0_i32, %c0_i32_0 : i32, i32, i32
  }
}

</mosaic_0001>

<llo_original>
// kernel: tpu_custom_call.1
$region0: #{tpu_custom_call.1}
  #allocation0 [shape = 'u32[]', space=smem, size = 0x4, offset = 0x4, fixed_abs, tag = 'smem constant byte address 0x4 - core index']
  #allocation1 [shape = 'u32[144,128]{1,0:T(1,128)}', space=vmem, size = 0x12000, scoped, tag = 'internal scratch']
  #allocation2 [shape = 'f32[1,1]{1,0:T(1,128)S(1)}', space=vmem, size = 0x200, scoped, tag = 'scoped memory for tpu_custom_call.1']
  %s0 = inlined_call_operand.hbm [shape: f32[8,32], index: 0, kind: input, shape index: {}]
  %s1 = inlined_call_operand.hbm [shape: bf16[32,128], index: 1, kind: input, shape index: {}]
  %s2 = inlined_call_operand.vmem [shape: f32[1,128], index: 2, kind: input, shape index: {}]
  %s3 = inlined_call_operand.hbm [shape: bf16[128,128], index: 3, kind: input, shape index: {}]
  %s4 = inlined_call_operand.vmem [shape: f32[1,128], index: 4, kind: input, shape index: {}]
  %s5 = inlined_call_operand.vmem [shape: bf16[1,128], index: 5, kind: input, shape index: {}]
  %s6 = inlined_call_operand.<no memory space> [shape: f32[1,1], index: 6, kind: input, shape index: {}]
  %s7 = inlined_call_operand.hbm [shape: f32[1,1,8], index: 7, kind: output, shape index: {}]
  %s8 = sld [smem:[#allocation0]]
  $region50: #{tpu_custom_call.1} parent=0
    _
  %s10 = ssub.s32 1, %s8
  %s11 = scalar_select 0, %s10, %s8
  %v12 = vstv %s6
  %13 = vst [vmem:[#allocation2] sm:$0x1] %v12
  $region1: #{tpu_custom_call.1} parent=0
    #allocation3 [shape = 'u8[4096]{0}', space=vmem, size = 0x1000, scoped, tag = 'input window, operand 0, single buffered']
    #allocation4 [shape = 's32[1]{0}', space=sflag, size = 0x4, scoped, tag = 'scoped memory for tpu_custom_call.1']
    #allocation5 [shape = 's32[1]{0}', space=sflag, size = 0x4, scoped, tag = 'scoped memory for tpu_custom_call.1']
    #allocation6 [shape = 'u8[8192]{0}', space=vmem, size = 0x2000, scoped, tag = 'input window, operand 1, single buffered']
    #allocation7 [shape = 's32[1]{0}', space=sflag, size = 0x4, scoped, tag = 'scoped memory for tpu_custom_call.1']
    #allocation8 [shape = 'u8[32768]{0}', space=vmem, size = 0x8000, scoped, tag = 'input window, operand 3, single buffered']
    #allocation9 [shape = 'u8[512]{0}', space=vmem, size = 0x400, scoped, tag = 'output window, operand 0, single buffered']
    %14 = vsyncpa [#allocation4], 0
    %15 = vsyncpa [#allocation7], 0
    %16 = vsyncpa [#allocation5], 0
    // Predicated region
    $region2: #{tpu_custom_call.1} parent=1 // pred_check
      _
    $region3: #{tpu_custom_call.1} parent=1 // pred_check_branch
      %18 = sbr.rel (0) target = $region5
    $region4: #{tpu_custom_call.1} parent=1 // pred_region
      %s20 = ssub.s32 128, 128
      %21 = vsyncadd [#allocation4], %s20
      %s23 = sshll.u32 [#allocation3], 4
      %s24 = int_to_ptr.vmem [resolvable:$true] %s23
      %26 = dma.hbm_to_vmem [thread:$0]  %s0, 128, %s24, [#allocation4]
    $region5: #{tpu_custom_call.1} parent=1 // pred_fallthru
      _
    // Predicated region
    $region6: #{tpu_custom_call.1} parent=1 // pred_check
      _
    $region7: #{tpu_custom_call.1} parent=1 // pred_check_branch
      %28 = sbr.rel (0) target = $region9
    $region8: #{tpu_custom_call.1} parent=1 // pred_region
      %s30 = ssub.s32 256, 256
      %31 = vsyncadd [#allocation7], %s30
      %s32 = sshll.u32 [#allocation6], 4
      %s33 = int_to_ptr.vmem [resolvable:$true] %s32
      %38 = dma.hbm_to_vmem [thread:$0]  %s1, 256, %s33, [#allocation7], 64, 64, 4
    $region9: #{tpu_custom_call.1} parent=1 // pred_fallthru
      _
    // Predicated region
    $region10: #{tpu_custom_call.1} parent=1 // pred_check
      _
    $region11: #{tpu_custom_call.1} parent=1 // pred_check_branch
      %40 = sbr.rel (0) target = $region13
    $region12: #{tpu_custom_call.1} parent=1 // pred_region
      _
    $region13: #{tpu_custom_call.1} parent=1 // pred_fallthru
      _
    // Predicated region
    $region14: #{tpu_custom_call.1} parent=1 // pred_check
      _
    $region15: #{tpu_custom_call.1} parent=1 // pred_check_branch
      %42 = sbr.rel (0) target = $region17
    $region16: #{tpu_custom_call.1} parent=1 // pred_region
      %s44 = ssub.s32 1024, 1024
      %45 = vsyncadd [#allocation7], %s44
      %s46 = sshll.u32 [#allocation8], 4
      %s47 = int_to_ptr.vmem [resolvable:$true] %s46
      %52 = dma.hbm_to_vmem [thread:$0]  %s3, 1024, %s47, [#allocation7], 64, 64, 4
    $region17: #{tpu_custom_call.1} parent=1 // pred_fallthru
      _
    // Predicated region
    $region18: #{tpu_custom_call.1} parent=1 // pred_check
      _
    $region19: #{tpu_custom_call.1} parent=1 // pred_check_branch
      %54 = sbr.rel (0) target = $region21
    $region20: #{tpu_custom_call.1} parent=1 // pred_region
      _
    $region21: #{tpu_custom_call.1} parent=1 // pred_fallthru
      _
    // Predicated region
    $region22: #{tpu_custom_call.1} parent=1 // pred_check
      _
    $region23: #{tpu_custom_call.1} parent=1 // pred_check_branch
      %56 = sbr.rel (0) target = $region25
    $region24: #{tpu_custom_call.1} parent=1 // pred_region
      _
    $region25: #{tpu_custom_call.1} parent=1 // pred_fallthru
      _
    // Predicated region
    $region26: #{tpu_custom_call.1} parent=1 // pred_check
      _
    $region27: #{tpu_custom_call.1} parent=1 // pred_check_branch
      %58 = sbr.rel (0) target = $region29
    $region28: #{tpu_custom_call.1} parent=1 // pred_region
      _
    $region29: #{tpu_custom_call.1} parent=1 // pred_fallthru
      _
    // Predicated region
    $region30: #{tpu_custom_call.1} parent=1 // pred_check
      _
    $region31: #{tpu_custom_call.1} parent=1 // pred_check_branch
      %60 = sbr.rel (0) target = $region33
    $region32: #{tpu_custom_call.1} parent=1 // pred_region
      %61 = dma.done [#allocation4], 128
    $region33: #{tpu_custom_call.1} parent=1 // pred_fallthru
      _
    // Predicated region
    $region34: #{tpu_custom_call.1} parent=1 // pred_check
      _
    $region35: #{tpu_custom_call.1} parent=1 // pred_check_branch
      %63 = sbr.rel (0) target = $region37
    $region36: #{tpu_custom_call.1} parent=1 // pred_region
      %64 = dma.done [#allocation7], 256
    $region37: #{tpu_custom_call.1} parent=1 // pred_fallthru
      _
    // Predicated region
    $region38: #{tpu_custom_call.1} parent=1 // pred_check
      _
    $region39: #{tpu_custom_call.1} parent=1 // pred_check_branch
      %66 = sbr.rel (0) target = $region41
    $region40: #{tpu_custom_call.1} parent=1 // pred_region
      %67 = dma.done [#allocation7], 1024
    $region41: #{tpu_custom_call.1} parent=1 // pred_fallthru
      _
    %v69 = vld [vmem:[#allocation3] sm:$0xff]
    %v70 = vpack.c.bf16 %v69, %v69
    %v71 = vld [vmem:[#allocation6] sm:$0xf]
    %v72 = vld [vmem:[#allocation6 + $0x4] sm:$0xf]
    %v73 = vld [vmem:[#allocation6 + $0x8] sm:$0xf]
    %v74 = vld [vmem:[#allocation6 + $0xc] sm:$0xf]
    %v75 = vld [vmem:[%s2] sm:$0x1]
    %v77 = vlaneseq
    %v78 = vshrl.u32 %v77, 7
    %v79 = vsub.s32 0, %v78
    %v80 = vrot.slane %v75, %v79
    %v86 = vunpack.c.l.b16 %v71
    %v87 = vunpack.c.l.b16 %v72
    %v88 = vunpack.c.l.b16 %v73
    %v89 = vunpack.c.l.b16 %v74
    %v90 = vpack.c.b16 %v87, %v86
    %v91 = vpack.c.b16 %v89, %v88
    %vm94 = vcmask 261120
    %v96 = vsel %vm94, %v70, 0
    %98 = vmatprep.subr.bf16.mxu0 0
    %99 = vmatpush1.bf16.msra.mxu0 %v90
    %100 = vmatprep.subr.bf16.mxu0 0
    %101 = vmatpush1.bf16.msra.mxu0 %v91
    %102 = vmatprep.subr.bf16.mxu0 0
    %103 = vmatpush1.bf16.msra.mxu0 0
    %104 = vmatprep.subr.bf16.mxu0 0
    %105 = vmatpush1.bf16.msra.mxu0 0
    %106 = vmatprep.subr.bf16.mxu0 0
    %107 = vmatpush1.bf16.msra.mxu0 0
    %108 = vmatprep.subr.bf16.mxu0 0
    %109 = vmatpush1.bf16.msra.mxu0 0
    %110 = vmatprep.subr.bf16.mxu0 0
    %111 = vmatpush1.bf16.msra.mxu0 0
    %112 = vmatprep.subr.bf16.mxu0 0
    %113 = vmatpush1.bf16.msra.mxu0 0
    %114 = vmatprep.subr.bf16.mxu0 0
    %115 = vmatpush1.bf16.msra.mxu0 0
    %116 = vmatprep.subr.bf16.mxu0 0
    %117 = vmatpush1.bf16.msra.mxu0 0
    %118 = vmatprep.subr.bf16.mxu0 0
    %119 = vmatpush1.bf16.msra.mxu0 0
    %120 = vmatprep.subr.bf16.mxu0 0
    %121 = vmatpush1.bf16.msra.mxu0 0
    %122 = vmatprep.subr.bf16.mxu0 0
    %123 = vmatpush1.bf16.msra.mxu0 0
    %124 = vmatprep.subr.bf16.mxu0 0
    %125 = vmatpush1.bf16.msra.mxu0 0
    %126 = vmatprep.subr.bf16.mxu0 0
    %127 = vmatpush1.bf16.msra.mxu0 0
    %128 = vmatprep.subr.bf16.mxu0 0
    %129 = vmatpush1.bf16.msra.mxu0 0
    %130 = vmatprep.mubr.bf16.mxu0 0
    %131 = vmatmul.mubr.bf16.gmra.mrb[0].mxu0 %v96
    %v132 = vpop.f32.mrb[0].mxu0
    %v133 = vadd.f32 %v80, %v132
    %v134 = vpop.f32.mrb[0].mxu0
    %v135 = vpop.f32.mrb[0].mxu0
    %v136 = vpop.f32.mrb[0].mxu0
    %137 = vdwg.mxu0
    %v138 = vmax.f32 %v133, 0.0
    %v139 = vpack.c.bf16 %v138, %v138
    %v140 = vld [vmem:[#allocation8] sm:$0xf]
    %v141 = vld [vmem:[#allocation8 + $0x4] sm:$0xf]
    %v142 = vld [vmem:[#allocation8 + $0x8] sm:$0xf]
    %v143 = vld [vmem:[#allocation8 + $0xc] sm:$0xf]
    %v144 = vld [vmem:[#allocation8 + $0x10] sm:$0xf]
    %v145 = vld [vmem:[#allocation8 + $0x14] sm:$0xf]
    %v146 = vld [vmem:[#allocation8 + $0x18] sm:$0xf]
    %v147 = vld [vmem:[#allocation8 + $0x1c] sm:$0xf]
    %v148 = vld [vmem:[#allocation8 + $0x20] sm:$0xf]
    %v149 = vld [vmem:[#allocation8 + $0x24] sm:$0xf]
    %v150 = vld [vmem:[#allocation8 + $0x28] sm:$0xf]
    %v151 = vld [vmem:[#allocation8 + $0x2c] sm:$0xf]
    %v152 = vld [vmem:[#allocation8 + $0x30] sm:$0xf]
    %v153 = vld [vmem:[#allocation8 + $0x34] sm:$0xf]
    %v154 = vld [vmem:[#allocation8 + $0x38] sm:$0xf]
    %v155 = vld [vmem:[#allocation8 + $0x3c] sm:$0xf]
    %v156 = vld [vmem:[%s4] sm:$0x1]
    %v158 = vlaneseq
    %v159 = vshrl.u32 %v158, 7
    %v160 = vsub.s32 0, %v159
    %v161 = vrot.slane %v156, %v160
    %v179 = vunpack.c.l.b16 %v140
    %v180 = vunpack.c.l.b16 %v141
    %v181 = vunpack.c.l.b16 %v142
    %v182 = vunpack.c.l.b16 %v143
    %v183 = vunpack.c.l.b16 %v144
    %v184 = vunpack.c.l.b16 %v145
    %v185 = vunpack.c.l.b16 %v146
    %v186 = vunpack.c.l.b16 %v147
    %v187 = vunpack.c.l.b16 %v148
    %v188 = vunpack.c.l.b16 %v149
    %v189 = vunpack.c.l.b16 %v150
    %v190 = vunpack.c.l.b16 %v151
    %v191 = vunpack.c.l.b16 %v152
    %v192 = vunpack.c.l.b16 %v153
    %v193 = vunpack.c.l.b16 %v154
    %v194 = vunpack.c.l.b16 %v155
    %v195 = vpack.c.b16 %v180, %v179
    %v196 = vpack.c.b16 %v182, %v181
    %v197 = vpack.c.b16 %v184, %v183
    %v198 = vpack.c.b16 %v186, %v185
    %v199 = vpack.c.b16 %v188, %v187
    %v200 = vpack.c.b16 %v190, %v189
    %v201 = vpack.c.b16 %v192, %v191
    %v202 = vpack.c.b16 %v194, %v193
    %211 = vmatprep.subr.bf16.mxu0 0
    %212 = vmatpush1.bf16.msra.mxu0 %v195
    %213 = vmatprep.subr.bf16.mxu0 0
    %214 = vmatpush1.bf16.msra.mxu0 %v196
    %215 = vmatprep.subr.bf16.mxu0 0
    %216 = vmatpush1.bf16.msra.mxu0 %v197
    %217 = vmatprep.subr.bf16.mxu0 0
    %218 = vmatpush1.bf16.msra.mxu0 %v198
    %219 = vmatprep.subr.bf16.mxu0 0
    %220 = vmatpush1.bf16.msra.mxu0 %v199
    %221 = vmatprep.subr.bf16.mxu0 0
    %222 = vmatpush1.bf16.msra.mxu0 %v200
    %223 = vmatprep.subr.bf16.mxu0 0
    %224 = vmatpush1.bf16.msra.mxu0 %v201
    %225 = vmatprep.subr.bf16.mxu0 0
    %226 = vmatpush1.bf16.msra.mxu0 %v202
    %227 = vmatprep.subr.bf16.mxu0 0
    %228 = vmatpush1.bf16.msra.mxu0 0
    %229 = vmatprep.subr.bf16.mxu0 0
    %230 = vmatpush1.bf16.msra.mxu0 0
    %231 = vmatprep.subr.bf16.mxu0 0
    %232 = vmatpush1.bf16.msra.mxu0 0
    %233 = vmatprep.subr.bf16.mxu0 0
    %234 = vmatpush1.bf16.msra.mxu0 0
    %235 = vmatprep.subr.bf16.mxu0 0
    %236 = vmatpush1.bf16.msra.mxu0 0
    %237 = vmatprep.subr.bf16.mxu0 0
    %238 = vmatpush1.bf16.msra.mxu0 0
    %239 = vmatprep.subr.bf16.mxu0 0
    %240 = vmatpush1.bf16.msra.mxu0 0
    %241 = vmatprep.subr.bf16.mxu0 0
    %242 = vmatpush1.bf16.msra.mxu0 0
    %243 = vmatprep.mubr.bf16.mxu0 0
    %244 = vmatmul.mubr.bf16.gmra.mrb[0].mxu0 %v139
    %v245 = vpop.f32.mrb[0].mxu0
    %v246 = vadd.f32 %v161, %v245
    %v247 = vpop.f32.mrb[0].mxu0
    %v248 = vpop.f32.mrb[0].mxu0
    %v249 = vpop.f32.mrb[0].mxu0
    %250 = vdwg.mxu0
    %v251 = vmax.f32 %v246, 0.0
    %v252 = vld [vmem:[%s5] sm:$0x1]
    %v253 = vpack.c.bf16 %v251, %v251
    %v254 = vld [vmem:[#allocation2] sm:$0x1]
    %256 = vset.pattern.permute.xlu0 0
    %257 = vperm.xlu0 %256, %v254
    %v258 = vpop.permute.xlu0 %257
    %v260 = vlaneseq
    %v261 = vshrl.u32 %v260, 7
    %v262 = vsub.s32 0, %v261
    %v263 = vrot.slane %v258, %v262
    %264 = vmatprep.subr.bf16.mxu0 0
    %265 = vmatpush1.bf16.xpose.msra.mxu0 %v253
    %266 = vmatprep.subr.bf16.mxu0 0
    %267 = vmatpush1.bf16.xpose.msra.mxu0 0
    %268 = vmatprep.subr.bf16.mxu0 0
    %269 = vmatpush1.bf16.xpose.msra.mxu0 0
    %270 = vmatprep.subr.bf16.mxu0 0
    %271 = vmatpush1.bf16.xpose.msra.mxu0 0
    %272 = vmatprep.subr.bf16.mxu0 0
    %273 = vmatpush1.bf16.xpose.msra.mxu0 0
    %274 = vmatprep.subr.bf16.mxu0 0
    %275 = vmatpush1.bf16.xpose.msra.mxu0 0
    %276 = vmatprep.subr.bf16.mxu0 0
    %277 = vmatpush1.bf16.xpose.msra.mxu0 0
    %278 = vmatprep.subr.bf16.mxu0 0
    %279 = vmatpush1.bf16.xpose.msra.mxu0 0
    %280 = vmatprep.subr.bf16.mxu0 0
    %281 = vmatpush1.bf16.xpose.msra.mxu0 0
    %282 = vmatprep.subr.bf16.mxu0 0
    %283 = vmatpush1.bf16.xpose.msra.mxu0 0
    %284 = vmatprep.subr.bf16.mxu0 0
    %285 = vmatpush1.bf16.xpose.msra.mxu0 0
    %286 = vmatprep.subr.bf16.mxu0 0
    %287 = vmatpush1.bf16.xpose.msra.mxu0 0
    %288 = vmatprep.subr.bf16.mxu0 0
    %289 = vmatpush1.bf16.xpose.msra.mxu0 0
    %290 = vmatprep.subr.bf16.mxu0 0
    %291 = vmatpush1.bf16.xpose.msra.mxu0 0
    %292 = vmatprep.subr.bf16.mxu0 0
    %293 = vmatpush1.bf16.xpose.msra.mxu0 0
    %294 = vmatprep.subr.bf16.mxu0 0
    %295 = vmatpush1.bf16.xpose.msra.mxu0 0
    %296 = vmatprep.mubr.bf16.mxu0 0
    %297 = vmatmul.mubr.bf16.gmra.mrb[0].mxu0 %v252
    %v298 = vpop.f32.mrb[0].mxu0
    %v299 = vadd.f32 %v263, %v298
    %v300 = vpop.f32.mrb[0].mxu0
    %v301 = vpop.f32.mrb[0].mxu0
    %v302 = vpop.f32.mrb[0].mxu0
    %303 = vdwg.mxu0
    %vm304 = vcmask 57344
    %305 = vst.msk [vmem:[#allocation9] sm:$0x1] %vm304, %v299
    // Predicated region
    $region42: #{tpu_custom_call.1} parent=1 // pred_check
      _
    $region43: #{tpu_custom_call.1} parent=1 // pred_check_branch
      %307 = sbr.rel (0) target = $region45
    $region44: #{tpu_custom_call.1} parent=1 // pred_region
      %s309 = ssub.s32 16, 16
      %310 = vsyncadd [#allocation5], %s309
      %s312 = sshll.u32 [#allocation9], 4
      %s313 = int_to_ptr.vmem [resolvable:$true] %s312
      %315 = dma.vmem_to_hbm [thread:$0]  %s313, 16, %s7, [#allocation5]
    $region45: #{tpu_custom_call.1} parent=1 // pred_fallthru
      _
    // Predicated region
    $region46: #{tpu_custom_call.1} parent=1 // pred_check
      _
    $region47: #{tpu_custom_call.1} parent=1 // pred_check_branch
      %317 = sbr.rel (0) target = $region49
    $region48: #{tpu_custom_call.1} parent=1 // pred_region
      %318 = dma.done [#allocation5], 16
    $region49: #{tpu_custom_call.1} parent=1 // pred_fallthru
      _
    %319 = vsyncpa [#allocation4], 1
    %320 = vsyncpa [#allocation7], 1
    %321 = vsyncpa [#allocation5], 1

</llo_original>
